<compile_context>
chip_gen: v7x
topology: tpu7x:2x2x1
jax: 0.10.0
libtpu: 0.0.40
codegen_flags: <defaults>
</compile_context>

<pallas_src>
import numpy as np
import jax
import jax.numpy as jnp
from jax import lax
from jax.experimental import pallas as pl
from jax.experimental.pallas import tpu as pltpu

FOCAL_GAMMA = 2.0            # == 2 -> squared focal weight (no pow in-kernel)
LAMBDA_TEMP = 0.5
LAMBDA_STRUCT = 0.3
LAMBDA_KF = 0.2
LAMBDA_MOTION = 0.4
EPS = 1e-6
LANE = 128

_DEFAULT_MIN_PALLAS_ELEMS = 1 << 15   # below this, fixed launch cost dominates


# ---------------------------------------------------------------------------
# hardware-aware budgets
# ---------------------------------------------------------------------------
def _vmem_capacity_bytes():
    try:
        return int(pltpu.get_tpu_info().vmem_capacity_bytes)
    except Exception:
        return 128 << 20


def _budgets():
    cap = _vmem_capacity_bytes()
    small_vmem = cap <= (96 << 20)          # v7x: 64 MiB physical per TC
    mask_blk = (512 << 10) if small_vmem else (1 << 20)   # per-input block bytes
    temp_blk = (1 << 20) if small_vmem else (2 << 20)
    vmem_limit = (32 << 20) if small_vmem else (64 << 20)
    return mask_blk, temp_blk, vmem_limit


# ---------------------------------------------------------------------------
# fused mask kernel: dice sums + focal-BCE sum + structural (Sobel) SSE.
# Border handling done in-kernel via zero-filled shifts (no host padding).
# Per-step results are accumulated as lane-wise partial sums into the
# VMEM-resident (1, 6, W) output block; the cross-lane reduce happens once in
# the wrapper.
# ---------------------------------------------------------------------------
def _make_mask_kernel(H, W, hard_targets):
    def kernel(pred_ref, targ_ref, out_ref):
        @pl.when(pl.program_id(1) == 0)
        def _init():
            out_ref[...] = jnp.zeros_like(out_ref)

        p = pred_ref[...].astype(jnp.float32)        # (Bt, H, W)
        t = targ_ref[...].astype(jnp.float32)
        bt = p.shape[0]

        def acc(row, x):
            # lane-wise partial sum, no cross-lane reduction in-kernel
            out_ref[0:1, row:row + 1, :] += jnp.sum(x, axis=(0, 1), keepdims=True)

        # ---- dice statistics ------------------------------------------------
        acc(0, p * t)
        acc(1, p)
        acc(2, t)

        # ---- focal BCE (torch binary_cross_entropy with -100 log clamp) -----
        log_p = jnp.maximum(jnp.log(p), -100.0)
        log_1mp = jnp.maximum(jnp.log(1.0 - p), -100.0)
        bce = -(t * log_p + (1.0 - t) * log_1mp)
        if hard_targets:
            # exact for t in {0, 1}; avoids the exp (EUP) on v5e
            pt = t * p + (1.0 - t) * (1.0 - p)
        else:
            pt = jnp.exp(-bce)
        wgt = 1.0 - pt
        acc(3, (wgt * wgt) * bce)                    # gamma == 2 -> square

        # ---- structural loss: separable Sobel on d = p - t (linearity) ------
        # "same" zero padding is realized by zero-filled shifts (concatenate).
        d = p - t
        zrow = jnp.zeros((bt, 1, W), jnp.float32)
        d_m1 = jnp.concatenate([zrow, d[:, :H - 1, :]], axis=1)   # d(i-1, j)
        d_p1 = jnp.concatenate([d[:, 1:, :], zrow], axis=1)       # d(i+1, j)
        tv = d_m1 + 2.0 * d + d_p1          # vertical [1, 2, 1]
        td = d_p1 - d_m1                    # vertical [-1, 0, 1]
        zcol = jnp.zeros((bt, H, 1), jnp.float32)
        tv_l = jnp.concatenate([zcol, tv[:, :, :W - 1]], axis=2)  # tv(i, j-1)
        tv_r = jnp.concatenate([tv[:, :, 1:], zcol], axis=2)      # tv(i, j+1)
        td_l = jnp.concatenate([zcol, td[:, :, :W - 1]], axis=2)
        td_r = jnp.concatenate([td[:, :, 1:], zcol], axis=2)
        gx = tv_r - tv_l                    # == conv2d(d, sobel_x, padding=1)
        gy = td_l + 2.0 * td + td_r         # == conv2d(d, sobel_y, padding=1)
        acc(4, gx * gx)
        acc(5, gy * gy)

    return kernel


def _mask_losses_xla(pred, targ):
    """Pure-XLA fallback for tiny problems."""
    B, C, H, W = pred.shape
    n = B * C * H * W
    p = pred.astype(jnp.float32)
    t = targ.astype(jnp.float32)
    pf = p.reshape(-1)
    tf_ = t.reshape(-1)
    inter = jnp.sum(pf * tf_)
    dice_loss = 1.0 - (2.0 * inter + 1.0) / (jnp.sum(pf) + jnp.sum(tf_) + 1.0)
    log_p = jnp.maximum(jnp.log(pf), -100.0)
    log_1mp = jnp.maximum(jnp.log(1.0 - pf), -100.0)
    bce = -(tf_ * log_p + (1.0 - tf_) * log_1mp)
    pt = jnp.exp(-bce)
    focal = jnp.mean(((1.0 - pt) ** FOCAL_GAMMA) * bce)
    main = 0.5 * dice_loss + 0.5 * focal

    d = (p - t).reshape(B * C, H, W)
    dp = jnp.pad(d, ((0, 0), (1, 1), (1, 1)))
    tv = dp[:, :H, :] + 2.0 * dp[:, 1:H + 1, :] + dp[:, 2:, :]
    td = dp[:, 2:, :] - dp[:, :H, :]
    gx = tv[:, :, 2:] - tv[:, :, :W]
    gy = td[:, :, :W] + 2.0 * td[:, :, 1:W + 1] + td[:, :, 2:]
    struct = jnp.sum(gx * gx) / n + jnp.sum(gy * gy) / n
    return main, struct


def mask_losses(pred, targ, *, hard_targets=False,
                min_pallas_elems=_DEFAULT_MIN_PALLAS_ELEMS):
    """Returns (main_loss, structural_loss) in one fused Pallas pass."""
    B, C, H, W = pred.shape
    # The reference F.conv2d with a (1,1,3,3) Sobel kernel requires C == 1.
    assert C == 1, "STMTKFLoss mask path requires single-channel masks (C == 1)"
    n = B * C * H * W
    if n < min_pallas_elems or H < 2 or W < 2:
        return _mask_losses_xla(pred, targ)

    mask_blk, _, vmem_limit = _budgets()
    n_img = B * C
    p = pred.reshape(n_img, H, W)                 # no astype / pad: native dtype
    t = targ.reshape(n_img, H, W)

    # Parallel chunks (dual-TC on v7x), then grid steps of Bt images each
    # (Bt divides the per-chunk image count exactly -> no batch padding).
    nc = 2 if (n_img >= 2 and n_img % 2 == 0) else 1
    m = n_img // nc
    max_bt = max(1, mask_blk // (H * W * 4))
    bt = 1
    for cand in range(min(m, max_bt), 0, -1):
        if m % cand == 0:
            bt = cand
            break
    steps = m // bt

    outs = pl.pallas_call(
        _make_mask_kernel(H, W, hard_targets),
        out_shape=jax.ShapeDtypeStruct((nc, 6, W), jnp.float32),
        grid_spec=pltpu.PrefetchScalarGridSpec(
            num_scalar_prefetch=0,
            grid=(nc, steps),
            in_specs=[
                pl.BlockSpec((bt, H, W), lambda c, s: (c * steps + s, 0, 0)),
                pl.BlockSpec((bt, H, W), lambda c, s: (c * steps + s, 0, 0)),
            ],
            out_specs=pl.BlockSpec((1, 6, W), lambda c, s: (c, 0, 0)),
        ),
        compiler_params=pltpu.CompilerParams(
            dimension_semantics=("parallel", "arbitrary"),
            vmem_limit_bytes=vmem_limit),
    )(p, t)

    stats = jnp.sum(outs, axis=(0, 2))            # tiny (nc, 6, W) -> (6,)
    inter, psum, tsum, fsum, gx2, gy2 = (stats[i] for i in range(6))

    smooth = 1.0
    dice_loss = 1.0 - (2.0 * inter + smooth) / (psum + tsum + smooth)
    focal_loss = fsum / n
    main = 0.5 * dice_loss + 0.5 * focal_loss
    struct = (gx2 + gy2) / n
    return main, struct


# ---------------------------------------------------------------------------
# temporal consistency: MSE of frame-to-frame differences.
# (1, T, TS) blocks read once; ragged lane tails masked in-kernel (no pad);
# per-batch partial sums so the batch axis can run on both v7x TensorCores.
# ---------------------------------------------------------------------------
def _make_temporal_kernel(S, TS, need_mask):
    def kernel(pr_ref, tr_ref, out_ref):
        @pl.when(pl.program_id(1) == 0)
        def _init():
            out_ref[...] = jnp.zeros_like(out_ref)

        x = pr_ref[0].astype(jnp.float32)          # (T, TS)
        y = tr_ref[0].astype(jnp.float32)
        dd = (x[1:, :] - x[:-1, :]) - (y[1:, :] - y[:-1, :])
        if need_mask:
            col = pl.program_id(1) * TS + lax.broadcasted_iota(jnp.int32, dd.shape, 1)
            dd = jnp.where(col < S, dd, 0.0)
        out_ref[0:1, :] += jnp.sum(dd * dd, axis=0, keepdims=True)

    return kernel


def _temporal_loss_xla(seq_pred, seq_targ):
    sp = seq_pred.astype(jnp.float32)
    st = seq_targ.astype(jnp.float32)
    pd = sp[:, 1:] - sp[:, :-1]
    td = st[:, 1:] - st[:, :-1]
    return jnp.mean((pd - td) ** 2)


def temporal_loss(seq_pred, seq_targ, *, min_pallas_elems=_DEFAULT_MIN_PALLAS_ELEMS):
    B, T, H, W = seq_pred.shape
    if T < 2 or B * T * H * W < min_pallas_elems:
        return _temporal_loss_xla(seq_pred, seq_targ)

    n = B * (T - 1) * H * W
    S = H * W
    _, temp_blk, vmem_limit = _budgets()
    ts_cap = max(LANE, (temp_blk // (T * 4)) // LANE * LANE)
    if S <= ts_cap:
        TS, ns, need_mask = S, 1, False            # full row: no 128 constraint
    else:
        TS = ts_cap                                # multiple of 128
        ns = -(-S // TS)
        need_mask = (S % TS) != 0

    p = seq_pred.reshape(B, T, S)
    t = seq_targ.reshape(B, T, S)

    outs = pl.pallas_call(
        _make_temporal_kernel(S, TS, need_mask),
        out_shape=jax.ShapeDtypeStruct((B, TS), jnp.float32),
        grid_spec=pltpu.PrefetchScalarGridSpec(
            num_scalar_prefetch=0,
            grid=(B, ns),
            in_specs=[
                pl.BlockSpec((1, T, TS), lambda b, s: (b, 0, s)),
                pl.BlockSpec((1, T, TS), lambda b, s: (b, 0, s)),
            ],
            out_specs=pl.BlockSpec((1, TS), lambda b, s: (b, 0)),
        ),
        compiler_params=pltpu.CompilerParams(
            dimension_semantics=("parallel", "arbitrary"),
            vmem_limit_bytes=vmem_limit),
    )(p, t)
    return jnp.sum(outs) / n


# ---------------------------------------------------------------------------
# Kalman regularisation: ||F - I||_F in plain jnp (a Pallas launch for a 4x4
# matrix is pure overhead) + fixed eigenvalue stability penalty.
# ---------------------------------------------------------------------------
def kf_regularization(F_mat, eig_penalty):
    eye = jnp.eye(F_mat.shape[-1], dtype=jnp.float32)
    fro = jnp.sqrt(jnp.sum((F_mat.astype(jnp.float32) - eye) ** 2))
    return fro + 10.0 * eig_penalty


# ---------------------------------------------------------------------------
# full forward (input_type='mask'; first call -> default non-adaptive weights)
# ---------------------------------------------------------------------------
def stmtkf_loss_pallas(predictions, targets, seq_preds, seq_targets, F_mat,
                       eig_penalty, *, hard_targets=False,
                       min_pallas_elems=_DEFAULT_MIN_PALLAS_ELEMS):
    losses = {}
    main, struct = mask_losses(predictions, targets, hard_targets=hard_targets,
                               min_pallas_elems=min_pallas_elems)
    losses["main"] = main
    losses["structural"] = struct
    losses["temporal"] = temporal_loss(seq_preds, seq_targets,
                                       min_pallas_elems=min_pallas_elems)
    losses["kf"] = kf_regularization(F_mat, eig_penalty)
    losses["motion"] = jnp.float32(0.0)   # input_type == 'mask' -> motion loss 0

    weights = {
        "main": 1.0,
        "temporal": LAMBDA_TEMP,
        "structural": LAMBDA_STRUCT,
        "kf": LAMBDA_KF,
        "motion": LAMBDA_MOTION,
    }
    total = sum(w * losses[k] for k, w in weights.items())
    losses["total"] = total
    return total, losses


# ---------------------------------------------------------------------------
# pure-JAX reference (independent implementation using lax.conv) for checking
# ---------------------------------------------------------------------------
def reference_loss(predictions, targets, seq_preds, seq_targets, F_mat, eig_penalty):
    pf = predictions.reshape(-1)
    tf_ = targets.reshape(-1)
    inter = jnp.sum(pf * tf_)
    dice = (2.0 * inter + 1.0) / (jnp.sum(pf) + jnp.sum(tf_) + 1.0)
    dice_loss = 1.0 - dice
    log_p = jnp.maximum(jnp.log(pf), -100.0)
    log_1mp = jnp.maximum(jnp.log(1.0 - pf), -100.0)
    bce = -(tf_ * log_p + (1.0 - tf_) * log_1mp)
    pt = jnp.exp(-bce)
    focal = jnp.mean(((1.0 - pt) ** FOCAL_GAMMA) * bce)
    main = 0.5 * dice_loss + 0.5 * focal

    pd = seq_preds[:, 1:] - seq_preds[:, :-1]
    td = seq_targets[:, 1:] - seq_targets[:, :-1]
    temporal = jnp.mean((pd - td) ** 2)

    sx = jnp.array([[-1, 0, 1], [-2, 0, 2], [-1, 0, 1]], jnp.float32).reshape(1, 1, 3, 3)
    sy = jnp.array([[-1, -2, -1], [0, 0, 0], [1, 2, 1]], jnp.float32).reshape(1, 1, 3, 3)

    def conv(x, k):
        return lax.conv_general_dilated(
            x, k, (1, 1), ((1, 1), (1, 1)), dimension_numbers=("NCHW", "OIHW", "NCHW"))

    gdx = jnp.mean((conv(predictions, sx) - conv(targets, sx)) ** 2)
    gdy = jnp.mean((conv(predictions, sy) - conv(targets, sy)) ** 2)
    struct = gdx + gdy

    eye = jnp.eye(F_mat.shape[-1], dtype=jnp.float32)
    kf = jnp.sqrt(jnp.sum((F_mat - eye) ** 2)) + 10.0 * eig_penalty

    return main + LAMBDA_TEMP * temporal + LAMBDA_STRUCT * struct + LAMBDA_KF * kf


# ---------------------------------------------------------------------------
# main
# ---------------------------------------------------------------------------
if __name__ == "__main__":
    key = jax.random.PRNGKey(0)
    k1, k2, k3, k4 = jax.random.split(key, 4)

    B, C, H, W, T = 2, 1, 16, 16, 8

    predictions = jax.nn.sigmoid(jax.random.normal(k1, (B, C, H, W), jnp.float32))
    targets = (jax.random.uniform(k2, (B, C, H, W), jnp.float32) > 0.5).astype(jnp.float32)
    seq_preds = jax.nn.sigmoid(jax.random.normal(k3, (B, T, H, W), jnp.float32))
    seq_targets = jax.nn.sigmoid(jax.random.normal(k4, (B, T, H, W), jnp.float32))

    # Deterministic Kalman transition matrix F (constant-velocity model, slight growth on vx).
    F_np = np.eye(4, dtype=np.float32)
    F_np[0, 2] = 1.0
    F_np[1, 3] = 1.0
    F_np[2, 2] = 1.05
    F_mat = jnp.asarray(F_np)

    # TODO(synk): nonsymmetric eigendecomposition (torch.linalg.eigvals) has no
    # Pallas/TPU equivalent; computed once on host with numpy for the fixed parameter F.
    eigvals = np.linalg.eigvals(F_np)
    eig_penalty = float(np.sum(np.maximum(np.abs(eigvals) - 1.0, 0.0)))

    # min_pallas_elems=0 forces the Pallas path even at this small test size
    # (normally a size this small would take the pure-XLA fallback).
    total, losses = stmtkf_loss_pallas(
        predictions, targets, seq_preds, seq_targets, F_mat, eig_penalty,
        min_pallas_elems=0)
    total = jax.block_until_ready(total)

    ref = jax.block_until_ready(
        reference_loss(predictions, targets, seq_preds, seq_targets, F_mat, eig_penalty))

    assert bool(jnp.isfinite(total)), "total loss is not finite"
    assert abs(float(total) - float(ref)) < 5e-3, (float(total), float(ref))

    print("KERNEL_OK")
</pallas_src>

<mosaic_0001>
module attributes {stable_mosaic.version = 11 : i64} {
  func.func @kernel(%arg0: i32, %arg1: i32, %arg2: memref<1x16x16xf32, #tpu.memory_space<vmem>>, %arg3: memref<1x16x16xf32, #tpu.memory_space<vmem>>, %arg4: memref<1x6x16xf32, #tpu.memory_space<vmem>>) attributes {dimension_semantics = [#tpu.dimension_semantics<parallel>, #tpu.dimension_semantics<arbitrary>], iteration_bounds = array<i64: 2, 1>, scalar_prefetch = 0 : i64, scratch_operands = 0 : i64, tpu.core_type = #tpu.core_type<tc>, window_params = [{transform_indices = @transform_0, window_bounds = array<i64: 1, 16, 16>}, {transform_indices = @transform_1, window_bounds = array<i64: 1, 16, 16>}, {transform_indices = @transform_2, window_bounds = array<i64: 1, 6, 16>}]} {
    %c0_i32 = arith.constant 0 : i32
    %0 = arith.cmpi eq, %arg1, %c0_i32 : i32
    %1 = arith.extui %0 : i1 to i32
    %c0_i32_0 = arith.constant 0 : i32
    %2 = arith.cmpi ne, %1, %c0_i32_0 : i32
    scf.if %2 {
      %cst_53 = arith.constant 0.000000e+00 : f32
      %85 = vector.broadcast %cst_53 : f32 to vector<1x6x16xf32>
      %c0_54 = arith.constant 0 : index
      %c0_55 = arith.constant 0 : index
      %c0_56 = arith.constant 0 : index
      %86 = vector.load %arg4[%c0_54, %c0_55, %c0_56] : memref<1x6x16xf32, #tpu.memory_space<vmem>>, vector<1x6x16xf32>
      tpu.vector_store %arg4[%c0_54, %c0_55, %c0_56], %85 {strides = array<i32>} : memref<1x6x16xf32, #tpu.memory_space<vmem>>, vector<1x6x16xf32>,
    } else {
    }
    %c0 = arith.constant 0 : index
    %c0_1 = arith.constant 0 : index
    %c0_2 = arith.constant 0 : index
    %3 = vector.load %arg2[%c0, %c0_1, %c0_2] : memref<1x16x16xf32, #tpu.memory_space<vmem>>, vector<1x16x16xf32>
    %c0_3 = arith.constant 0 : index
    %c0_4 = arith.constant 0 : index
    %c0_5 = arith.constant 0 : index
    %4 = vector.load %arg3[%c0_3, %c0_4, %c0_5] : memref<1x16x16xf32, #tpu.memory_space<vmem>>, vector<1x16x16xf32>
    %5 = arith.mulf %3, %4 : vector<1x16x16xf32>
    %c0_6 = arith.constant 0 : index
    %c0_7 = arith.constant 0 : index
    %c0_8 = arith.constant 0 : index
    %6 = vector.load %arg4[%c0_6, %c0_7, %c0_8] : memref<1x6x16xf32, #tpu.memory_space<vmem>>, vector<1x1x16xf32>
    %cst = arith.constant dense<0.000000e+00> : vector<16xf32>
    %7 = vector.multi_reduction <add>, %5, %cst [0, 1] : vector<1x16x16xf32> to vector<16xf32>
    %8 = vector.shape_cast %7 : vector<16xf32> to vector<1x1x16xf32>
    %9 = arith.addf %6, %8 : vector<1x1x16xf32>
    %c0_9 = arith.constant 0 : index
    %c0_10 = arith.constant 0 : index
    %c0_11 = arith.constant 0 : index
    %10 = vector.load %arg4[%c0_9, %c0_10, %c0_11] : memref<1x6x16xf32, #tpu.memory_space<vmem>>, vector<1x1x16xf32>
    tpu.vector_store %arg4[%c0_9, %c0_10, %c0_11], %9 {strides = array<i32>} : memref<1x6x16xf32, #tpu.memory_space<vmem>>, vector<1x1x16xf32>,
    %c0_12 = arith.constant 0 : index
    %c1 = arith.constant 1 : index
    %c0_13 = arith.constant 0 : index
    %11 = vector.load %arg4[%c0_12, %c1, %c0_13] : memref<1x6x16xf32, #tpu.memory_space<vmem>>, vector<1x1x16xf32>
    %cst_14 = arith.constant dense<0.000000e+00> : vector<16xf32>
    %12 = vector.multi_reduction <add>, %3, %cst_14 [0, 1] : vector<1x16x16xf32> to vector<16xf32>
    %13 = vector.shape_cast %12 : vector<16xf32> to vector<1x1x16xf32>
    %14 = arith.addf %11, %13 : vector<1x1x16xf32>
    %c0_15 = arith.constant 0 : index
    %c1_16 = arith.constant 1 : index
    %c0_17 = arith.constant 0 : index
    %15 = vector.load %arg4[%c0_15, %c1_16, %c0_17] : memref<1x6x16xf32, #tpu.memory_space<vmem>>, vector<1x1x16xf32>
    tpu.vector_store %arg4[%c0_15, %c1_16, %c0_17], %14 {strides = array<i32>} : memref<1x6x16xf32, #tpu.memory_space<vmem>>, vector<1x1x16xf32>,
    %c0_18 = arith.constant 0 : index
    %c2 = arith.constant 2 : index
    %c0_19 = arith.constant 0 : index
    %16 = vector.load %arg4[%c0_18, %c2, %c0_19] : memref<1x6x16xf32, #tpu.memory_space<vmem>>, vector<1x1x16xf32>
    %cst_20 = arith.constant dense<0.000000e+00> : vector<16xf32>
    %17 = vector.multi_reduction <add>, %4, %cst_20 [0, 1] : vector<1x16x16xf32> to vector<16xf32>
    %18 = vector.shape_cast %17 : vector<16xf32> to vector<1x1x16xf32>
    %19 = arith.addf %16, %18 : vector<1x1x16xf32>
    %c0_21 = arith.constant 0 : index
    %c2_22 = arith.constant 2 : index
    %c0_23 = arith.constant 0 : index
    %20 = vector.load %arg4[%c0_21, %c2_22, %c0_23] : memref<1x6x16xf32, #tpu.memory_space<vmem>>, vector<1x1x16xf32>
    tpu.vector_store %arg4[%c0_21, %c2_22, %c0_23], %19 {strides = array<i32>} : memref<1x6x16xf32, #tpu.memory_space<vmem>>, vector<1x1x16xf32>,
    %21 = math.log %3 : vector<1x16x16xf32>
    %cst_24 = arith.constant -1.000000e+02 : f32
    %22 = vector.broadcast %cst_24 : f32 to vector<1x16x16xf32>
    %23 = arith.maximumf %21, %22 : vector<1x16x16xf32>
    %cst_25 = arith.constant 1.000000e+00 : f32
    %24 = vector.broadcast %cst_25 : f32 to vector<1x16x16xf32>
    %25 = arith.subf %24, %3 : vector<1x16x16xf32>
    %26 = math.log %25 : vector<1x16x16xf32>
    %cst_26 = arith.constant -1.000000e+02 : f32
    %27 = vector.broadcast %cst_26 : f32 to vector<1x16x16xf32>
    %28 = arith.maximumf %26, %27 : vector<1x16x16xf32>
    %29 = arith.mulf %4, %23 : vector<1x16x16xf32>
    %cst_27 = arith.constant 1.000000e+00 : f32
    %30 = vector.broadcast %cst_27 : f32 to vector<1x16x16xf32>
    %31 = arith.subf %30, %4 : vector<1x16x16xf32>
    %32 = arith.mulf %31, %28 : vector<1x16x16xf32>
    %33 = arith.addf %29, %32 : vector<1x16x16xf32>
    %cst_28 = arith.constant 0.000000e+00 : f32
    %34 = vector.broadcast %cst_28 : f32 to vector<1x16x16xf32>
    %35 = arith.subf %34, %33 : vector<1x16x16xf32>
    %cst_29 = arith.constant 0.000000e+00 : f32
    %36 = vector.broadcast %cst_29 : f32 to vector<1x16x16xf32>
    %37 = arith.subf %36, %35 : vector<1x16x16xf32>
    %38 = math.exp %37 : vector<1x16x16xf32>
    %cst_30 = arith.constant 1.000000e+00 : f32
    %39 = vector.broadcast %cst_30 : f32 to vector<1x16x16xf32>
    %40 = arith.subf %39, %38 : vector<1x16x16xf32>
    %41 = arith.mulf %40, %40 : vector<1x16x16xf32>
    %42 = arith.mulf %41, %35 : vector<1x16x16xf32>
    %c0_31 = arith.constant 0 : index
    %c3 = arith.constant 3 : index
    %c0_32 = arith.constant 0 : index
    %43 = vector.load %arg4[%c0_31, %c3, %c0_32] : memref<1x6x16xf32, #tpu.memory_space<vmem>>, vector<1x1x16xf32>
    %cst_33 = arith.constant dense<0.000000e+00> : vector<16xf32>
    %44 = vector.multi_reduction <add>, %42, %cst_33 [0, 1] : vector<1x16x16xf32> to vector<16xf32>
    %45 = vector.shape_cast %44 : vector<16xf32> to vector<1x1x16xf32>
    %46 = arith.addf %43, %45 : vector<1x1x16xf32>
    %c0_34 = arith.constant 0 : index
    %c3_35 = arith.constant 3 : index
    %c0_36 = arith.constant 0 : index
    %47 = vector.load %arg4[%c0_34, %c3_35, %c0_36] : memref<1x6x16xf32, #tpu.memory_space<vmem>>, vector<1x1x16xf32>
    tpu.vector_store %arg4[%c0_34, %c3_35, %c0_36], %46 {strides = array<i32>} : memref<1x6x16xf32, #tpu.memory_space<vmem>>, vector<1x1x16xf32>,
    %48 = arith.subf %3, %4 : vector<1x16x16xf32>
    %cst_37 = arith.constant 0.000000e+00 : f32
    %49 = vector.broadcast %cst_37 : f32 to vector<1x1x16xf32>
    %50 = vector.extract_strided_slice %48 {offsets = [0, 0, 0], sizes = [1, 15, 16], strides = [1, 1, 1]} : vector<1x16x16xf32> to vector<1x15x16xf32>
    %51 = tpu.concatenate %49, %50 in 1 : vector<1x1x16xf32>, vector<1x15x16xf32> -> vector<1x16x16xf32>
    %52 = vector.extract_strided_slice %48 {offsets = [0, 1, 0], sizes = [1, 15, 16], strides = [1, 1, 1]} : vector<1x16x16xf32> to vector<1x15x16xf32>
    %53 = tpu.concatenate %52, %49 in 1 : vector<1x15x16xf32>, vector<1x1x16xf32> -> vector<1x16x16xf32>
    %cst_38 = arith.constant 2.000000e+00 : f32
    %54 = vector.broadcast %cst_38 : f32 to vector<1x16x16xf32>
    %55 = arith.mulf %54, %48 : vector<1x16x16xf32>
    %56 = arith.addf %51, %55 : vector<1x16x16xf32>
    %57 = arith.addf %56, %53 : vector<1x16x16xf32>
    %58 = arith.subf %53, %51 : vector<1x16x16xf32>
    %cst_39 = arith.constant 0.000000e+00 : f32
    %59 = vector.broadcast %cst_39 : f32 to vector<1x16x1xf32>
    %60 = vector.extract_strided_slice %57 {offsets = [0, 0, 0], sizes = [1, 16, 15], strides = [1, 1, 1]} : vector<1x16x16xf32> to vector<1x16x15xf32>
    %61 = tpu.concatenate %59, %60 in 2 : vector<1x16x1xf32>, vector<1x16x15xf32> -> vector<1x16x16xf32>
    %62 = vector.extract_strided_slice %57 {offsets = [0, 0, 1], sizes = [1, 16, 15], strides = [1, 1, 1]} : vector<1x16x16xf32> to vector<1x16x15xf32>
    %63 = tpu.concatenate %62, %59 in 2 : vector<1x16x15xf32>, vector<1x16x1xf32> -> vector<1x16x16xf32>
    %64 = vector.extract_strided_slice %58 {offsets = [0, 0, 0], sizes = [1, 16, 15], strides = [1, 1, 1]} : vector<1x16x16xf32> to vector<1x16x15xf32>
    %65 = tpu.concatenate %59, %64 in 2 : vector<1x16x1xf32>, vector<1x16x15xf32> -> vector<1x16x16xf32>
    %66 = vector.extract_strided_slice %58 {offsets = [0, 0, 1], sizes = [1, 16, 15], strides = [1, 1, 1]} : vector<1x16x16xf32> to vector<1x16x15xf32>
    %67 = tpu.concatenate %66, %59 in 2 : vector<1x16x15xf32>, vector<1x16x1xf32> -> vector<1x16x16xf32>
    %68 = arith.subf %63, %61 : vector<1x16x16xf32>
    %cst_40 = arith.constant 2.000000e+00 : f32
    %69 = vector.broadcast %cst_40 : f32 to vector<1x16x16xf32>
    %70 = arith.mulf %69, %58 : vector<1x16x16xf32>
    %71 = arith.addf %65, %70 : vector<1x16x16xf32>
    %72 = arith.addf %71, %67 : vector<1x16x16xf32>
    %73 = arith.mulf %68, %68 : vector<1x16x16xf32>
    %c0_41 = arith.constant 0 : index
    %c4 = arith.constant 4 : index
    %c0_42 = arith.constant 0 : index
    %74 = vector.load %arg4[%c0_41, %c4, %c0_42] : memref<1x6x16xf32, #tpu.memory_space<vmem>>, vector<1x1x16xf32>
    %cst_43 = arith.constant dense<0.000000e+00> : vector<16xf32>
    %75 = vector.multi_reduction <add>, %73, %cst_43 [0, 1] : vector<1x16x16xf32> to vector<16xf32>
    %76 = vector.shape_cast %75 : vector<16xf32> to vector<1x1x16xf32>
    %77 = arith.addf %74, %76 : vector<1x1x16xf32>
    %c0_44 = arith.constant 0 : index
    %c4_45 = arith.constant 4 : index
    %c0_46 = arith.constant 0 : index
    %78 = vector.load %arg4[%c0_44, %c4_45, %c0_46] : memref<1x6x16xf32, #tpu.memory_space<vmem>>, vector<1x1x16xf32>
    tpu.vector_store %arg4[%c0_44, %c4_45, %c0_46], %77 {strides = array<i32>} : memref<1x6x16xf32, #tpu.memory_space<vmem>>, vector<1x1x16xf32>,
    %79 = arith.mulf %72, %72 : vector<1x16x16xf32>
    %c0_47 = arith.constant 0 : index
    %c5 = arith.constant 5 : index
    %c0_48 = arith.constant 0 : index
    %80 = vector.load %arg4[%c0_47, %c5, %c0_48] : memref<1x6x16xf32, #tpu.memory_space<vmem>>, vector<1x1x16xf32>
    %cst_49 = arith.constant dense<0.000000e+00> : vector<16xf32>
    %81 = vector.multi_reduction <add>, %79, %cst_49 [0, 1] : vector<1x16x16xf32> to vector<16xf32>
    %82 = vector.shape_cast %81 : vector<16xf32> to vector<1x1x16xf32>
    %83 = arith.addf %80, %82 : vector<1x1x16xf32>
    %c0_50 = arith.constant 0 : index
    %c5_51 = arith.constant 5 : index
    %c0_52 = arith.constant 0 : index
    %84 = vector.load %arg4[%c0_50, %c5_51, %c0_52] : memref<1x6x16xf32, #tpu.memory_space<vmem>>, vector<1x1x16xf32>
    tpu.vector_store %arg4[%c0_50, %c5_51, %c0_52], %83 {strides = array<i32>} : memref<1x6x16xf32, #tpu.memory_space<vmem>>, vector<1x1x16xf32>,
    return
  }
  func.func @transform_0(%arg0: i32, %arg1: i32) -> (i32, i32, i32) {
    %c1_i32 = arith.constant 1 : i32
    %0 = arith.muli %arg0, %c1_i32 : i32
    %1 = arith.addi %0, %arg1 : i32
    %c0_i32 = arith.constant 0 : i32
    %c0_i32_0 = arith.constant 0 : i32
    %c0_i32_1 = arith.constant 0 : i32
    return %1, %c0_i32, %c0_i32_0 : i32, i32, i32
  }
  func.func @transform_1(%arg0: i32, %arg1: i32) -> (i32, i32, i32) {
    %c1_i32 = arith.constant 1 : i32
    %0 = arith.muli %arg0, %c1_i32 : i32
    %1 = arith.addi %0, %arg1 : i32
    %c0_i32 = arith.constant 0 : i32
    %c0_i32_0 = arith.constant 0 : i32
    %c0_i32_1 = arith.constant 0 : i32
    return %1, %c0_i32, %c0_i32_0 : i32, i32, i32
  }
  func.func @transform_2(%arg0: i32, %arg1: i32) -> (i32, i32, i32) {
    %c0_i32 = arith.constant 0 : i32
    %c0_i32_0 = arith.constant 0 : i32
    %c0_i32_1 = arith.constant 0 : i32
    return %arg0, %c0_i32, %c0_i32_0 : i32, i32, i32
  }
}

</mosaic_0001>

<llo_original>
// kernel: tpu_custom_call.1
$region0: #{tpu_custom_call.1}
  #allocation0 [shape = 'u32[]', space=smem, size = 0x4, offset = 0x4, fixed_abs, tag = 'smem constant byte address 0x4 - core index']
  #allocation1 [shape = 'u32[144,128]{1,0:T(1,128)}', space=vmem, size = 0x12000, scoped, tag = 'internal scratch']
  %s0 = inlined_call_operand.hbm [shape: f32[2,16,16], index: 0, kind: input, shape index: {}]
  %s1 = inlined_call_operand.hbm [shape: f32[2,16,16], index: 1, kind: input, shape index: {}]
  %s2 = inlined_call_operand.hbm [shape: f32[2,6,16], index: 2, kind: output, shape index: {}]
  %s3 = sld [smem:[#allocation0]]
  $region53: #{tpu_custom_call.1} parent=0
    _
  %s5 = ssub.s32 1, %s3
  %s6 = scalar_select 0, %s5, %s3
  $region1: #{tpu_custom_call.1} parent=0
    #allocation2 [shape = 'u8[16384]{0}', space=vmem, size = 0x4000, scoped, tag = 'input window, operand 0']
    #allocation3 [shape = 's32[2]{0}', space=sflag, size = 0x8, scoped, tag = 'scoped memory for tpu_custom_call.1']
    #allocation4 [shape = 's32[2]{0}', space=sflag, size = 0x8, scoped, tag = 'scoped memory for tpu_custom_call.1']
    #allocation5 [shape = 'u8[16384]{0}', space=vmem, size = 0x4000, scoped, tag = 'input window, operand 1']
    #allocation6 [shape = 's32[2]{0}', space=sflag, size = 0x8, scoped, tag = 'scoped memory for tpu_custom_call.1']
    #allocation7 [shape = 'u8[8192]{0}', space=vmem, size = 0x2000, scoped, tag = 'output window, operand 0']
    %7 = vsyncpa [#allocation3], 0
    %s8 = scalar_lea.sflag [#allocation3], 1
    %9 = vsyncpa %s8, 0
    %10 = vsyncpa [#allocation6], 0
    %s11 = scalar_lea.sflag [#allocation6], 1
    %12 = vsyncpa %s11, 0
    %13 = vsyncpa [#allocation4], 0
    %s14 = scalar_lea.sflag [#allocation4], 1
    %15 = vsyncpa %s14, 0
    loop: start=0, step=1, limit=4
    $region2: #{tpu_custom_call.1} parent=1 // loop_pre_header
      _
    $region3: #{tpu_custom_call.1} parent=1 // loop_header
      %s17 = sphi 0, %s21
      %p18 = scmp.ge.s32.totalorder %s17, 4
      %s24 = sphi 0, %s36
      %s25 = sphi 0, %s32
      %s26 = sphi 0, %s24
      %s27 = sphi 0, %s25
      %s28 = sphi 0, %s26
      %s29 = sphi 0, %s27
      %s41 = sphi 0, %s43
      %s44 = sphi 0, %s41
      %s45 = sphi 0, %s44
      %s61 = sphi 0, %s45
      %s69 = sphi 0, %s71
      %s72 = sphi 0, %s69
      %s73 = sphi 0, %s72
      %s89 = sphi 0, %s73
      %s95 = sphi 0, %s97
      %s98 = sphi 0, %s95
      %s99 = sphi 0, %s98
      %s115 = sphi 0, %s99
    $region4: #{tpu_custom_call.1} parent=1 // loop_header_branch
      %20 = sbr.rel (%p18) target = $region8
    $region5: #{tpu_custom_call.1} parent=1 // loop_body
      %s22 = ssub.s32 %s17, 1
      %s23 = ssub.s32 %s17, 2
      %s30 = sadd.s32 1, %s25
      %p31 = scmp.ge.s32.totalorder %s30, 1
      %s32 = scalar_select %p31, 0, %s30
      %s33 = sadd.s32 1, %s24
      %s34 = scalar_select %p31, %s33, %s24
      %p35 = scmp.ge.s32.totalorder %s34, 2
      %s36 = scalar_select %p35, 0, %s34
      %s37 = sadd.s32 %s24, %s25
      %s38 = sadd.s32 %s36, %s32
      %s39 = ssub.s32 %s37, %s38
      %p40 = scmp.eq.s32.totalorder %s39, 0
      %s42 = sadd.s32 %s41, 1
      %s43 = scalar_select %p40, %s41, %s42
      %p46 = pneg %p40
      %p47 = scmp.eq.s32.totalorder %s17, 1
      %p48 = por %p46, %p47
      %p49 = scmp.ne.s32.totalorder %s41, %s44
      %p50 = scmp.eq.s32.totalorder %s17, 0
      %p51 = por %p49, %p50
      %p52 = scmp.ne.s32.totalorder %s41, %s44
      %p53 = scmp.eq.s32.totalorder %s22, 1
      %p54 = por %p52, %p53
      %p55 = scmp.ne.s32.totalorder %s44, %s45
      %p56 = scmp.eq.s32.totalorder %s22, 0
      %p57 = por %p55, %p56
      %p58 = scmp.ne.s32.totalorder %s44, %s45
      %p59 = scmp.eq.s32.totalorder %s23, 1
      %p60 = por %p58, %p59
      %p62 = scmp.ne.s32.totalorder %s45, %s61
      %p63 = scmp.eq.s32.totalorder %s23, 0
      %p64 = por %p62, %p63
      %s65 = sadd.s32 %s24, %s25
      %s66 = sadd.s32 %s36, %s32
      %s67 = ssub.s32 %s65, %s66
      %p68 = scmp.eq.s32.totalorder %s67, 0
      %s70 = sadd.s32 %s69, 1
      %s71 = scalar_select %p68, %s69, %s70
      %p74 = pneg %p68
      %p75 = scmp.eq.s32.totalorder %s17, 1
      %p76 = por %p74, %p75
      %p77 = scmp.ne.s32.totalorder %s69, %s72
      %p78 = scmp.eq.s32.totalorder %s17, 0
      %p79 = por %p77, %p78
      %p80 = scmp.ne.s32.totalorder %s69, %s72
      %p81 = scmp.eq.s32.totalorder %s22, 1
      %p82 = por %p80, %p81
      %p83 = scmp.ne.s32.totalorder %s72, %s73
      %p84 = scmp.eq.s32.totalorder %s22, 0
      %p85 = por %p83, %p84
      %p86 = scmp.ne.s32.totalorder %s72, %s73
      %p87 = scmp.eq.s32.totalorder %s23, 1
      %p88 = por %p86, %p87
      %p90 = scmp.ne.s32.totalorder %s73, %s89
      %p91 = scmp.eq.s32.totalorder %s23, 0
      %p92 = por %p90, %p91
      %s93 = ssub.s32 %s24, %s36
      %p94 = scmp.eq.s32.totalorder %s93, 0
      %s96 = sadd.s32 %s95, 1
      %s97 = scalar_select %p94, %s95, %s96
      %p100 = pneg %p94
      %p101 = scmp.eq.s32.totalorder %s17, 1
      %p102 = por %p100, %p101
      %p103 = scmp.ne.s32.totalorder %s95, %s98
      %p104 = scmp.eq.s32.totalorder %s17, 0
      %p105 = por %p103, %p104
      %p106 = scmp.ne.s32.totalorder %s95, %s98
      %p107 = scmp.eq.s32.totalorder %s22, 1
      %p108 = por %p106, %p107
      %p109 = scmp.ne.s32.totalorder %s98, %s99
      %p110 = scmp.eq.s32.totalorder %s22, 0
      %p111 = por %p109, %p110
      %p112 = scmp.ne.s32.totalorder %s98, %s99
      %p113 = scmp.eq.s32.totalorder %s23, 1
      %p114 = por %p112, %p113
      %p116 = scmp.ne.s32.totalorder %s99, %s115
      %p117 = scmp.eq.s32.totalorder %s23, 0
      %p118 = por %p116, %p117
      %p119 = scmp.le.s32.totalorder 1, %s17
      %p120 = scmp.lt.s32.totalorder %s17, 3
      %p121 = pnand %p119, %p120
      %p122 = pneg %p121
      // Predicated region
      $region9: #{tpu_custom_call.1} parent=5 // pred_check
        _
      $region10: #{tpu_custom_call.1} parent=5 // pred_check_branch
        %124 = sbr.rel (%p121) target = $region12
      $region11: #{tpu_custom_call.1} parent=5 // pred_region
        %s125 = ssub.s32 %s17, 1
      $region12: #{tpu_custom_call.1} parent=5 // pred_fallthru
        _
      %p126 = scmp.lt.s32.totalorder %s17, 2
      // Predicated region
      $region13: #{tpu_custom_call.1} parent=5 // pred_check
        %p127 = pneg %p126
      $region14: #{tpu_custom_call.1} parent=5 // pred_check_branch
        %129 = sbr.rel (%p127) target = $region16
      $region15: #{tpu_custom_call.1} parent=5 // pred_region
        // Predicated region
        $region17: #{tpu_custom_call.1} parent=15 // pred_check
          %p130 = pneg %p51
        $region18: #{tpu_custom_call.1} parent=15 // pred_check_branch
          %132 = sbr.rel (%p130) target = $region20
        $region19: #{tpu_custom_call.1} parent=15 // pred_region
          %s133 = sand.u32 %s41, 1
          %s134 = scalar_lea.sflag [#allocation3], %s133
          %s135 = sand.u32 %s41, 1
          %s136 = smul.addr %s135, 16
          %s137 = scalar_lea.vmem [#allocation2], %s136
          %s138 = sadd.s32 %s24, %s25
          %s140 = ssub.s32 256, 256
          %141 = vsyncadd %s134, %s140
          %s142 = smul.addr %s138, 2
          %s143 = smul.addr %s142, 128
          %s144 = scalar_lea.hbm %s0, %s143
          %s145 = sshll.u32 %s137, 4
          %s146 = int_to_ptr.vmem [resolvable:$true] %s145
          %151 = dma.hbm_to_vmem [thread:$0]  %s144, 256, %s146, %s134, 128, 128, 8
        $region20: #{tpu_custom_call.1} parent=15 // pred_fallthru
          _
        // Predicated region
        $region21: #{tpu_custom_call.1} parent=15 // pred_check
          %p152 = pneg %p79
        $region22: #{tpu_custom_call.1} parent=15 // pred_check_branch
          %154 = sbr.rel (%p152) target = $region24
        $region23: #{tpu_custom_call.1} parent=15 // pred_region
          %s155 = sand.u32 %s69, 1
          %s156 = scalar_lea.sflag [#allocation6], %s155
          %s157 = sand.u32 %s69, 1
          %s158 = smul.addr %s157, 16
          %s159 = scalar_lea.vmem [#allocation5], %s158
          %s160 = sadd.s32 %s24, %s25
          %s162 = ssub.s32 256, 256
          %163 = vsyncadd %s156, %s162
          %s164 = smul.addr %s160, 2
          %s165 = smul.addr %s164, 128
          %s166 = scalar_lea.hbm %s1, %s165
          %s167 = sshll.u32 %s159, 4
          %s168 = int_to_ptr.vmem [resolvable:$true] %s167
          %173 = dma.hbm_to_vmem [thread:$0]  %s166, 256, %s168, %s156, 128, 128, 8
        $region24: #{tpu_custom_call.1} parent=15 // pred_fallthru
          _
      $region16: #{tpu_custom_call.1} parent=5 // pred_fallthru
        _
      %p174 = scmp.le.s32.totalorder 1, %s17
      %p175 = scmp.lt.s32.totalorder %s17, 3
      %p176 = pnand %p174, %p175
      %p177 = pneg %p176
      // Predicated region
      $region25: #{tpu_custom_call.1} parent=5 // pred_check
        _
      $region26: #{tpu_custom_call.1} parent=5 // pred_check_branch
        %179 = sbr.rel (%p176) target = $region28
      $region27: #{tpu_custom_call.1} parent=5 // pred_region
        %s180 = ssub.s32 %s17, 1
        %s181 = sand.u32 %s44, 1
        %s182 = scalar_lea.sflag [#allocation3], %s181
        %s183 = sand.u32 %s44, 1
        %s184 = smul.addr %s183, 16
        %s185 = scalar_lea.vmem [#allocation2], %s184
        // Predicated region
        $region29: #{tpu_custom_call.1} parent=27 // pred_check
          %p186 = pneg %p57
        $region30: #{tpu_custom_call.1} parent=27 // pred_check_branch
          %188 = sbr.rel (%p186) target = $region32
        $region31: #{tpu_custom_call.1} parent=27 // pred_region
          %189 = dma.done %s182, 256
        $region32: #{tpu_custom_call.1} parent=27 // pred_fallthru
          _
        %s190 = sand.u32 %s72, 1
        %s191 = scalar_lea.sflag [#allocation6], %s190
        %s192 = sand.u32 %s72, 1
        %s193 = smul.addr %s192, 16
        %s194 = scalar_lea.vmem [#allocation5], %s193
        // Predicated region
        $region33: #{tpu_custom_call.1} parent=27 // pred_check
          %p195 = pneg %p85
        $region34: #{tpu_custom_call.1} parent=27 // pred_check_branch
          %197 = sbr.rel (%p195) target = $region36
        $region35: #{tpu_custom_call.1} parent=27 // pred_region
          %198 = dma.done %s191, 256
        $region36: #{tpu_custom_call.1} parent=27 // pred_fallthru
          _
        %s199 = sand.u32 %s44, 1
        %s200 = scalar_lea.sflag [#allocation3], %s199
        %s201 = sand.u32 %s44, 1
        %s202 = smul.addr %s201, 16
        %s203 = scalar_lea.vmem [#allocation2], %s202
        %p204 = pneg %p57
        %p205 = pneg %p54
        %s206 = sand.u32 %s72, 1
        %s207 = scalar_lea.sflag [#allocation6], %s206
        %s208 = sand.u32 %s72, 1
        %s209 = smul.addr %s208, 16
        %s210 = scalar_lea.vmem [#allocation5], %s209
        %p211 = pneg %p85
        %p212 = pneg %p82
        %p213 = pneg %p111
        %p214 = pneg %p108
        %s215 = sand.u32 %s98, 1
        %s216 = scalar_lea.sflag [#allocation4], %s215
        %s217 = sand.u32 %s98, 1
        %s218 = smul.addr %s217, 8
        %s219 = scalar_lea.vmem [#allocation7], %s218
        %s220 = sadd.s32 %s26, %s27
        %s221 = sadd.s32 %s26, %s27
        %p222 = scmp.eq.s32.totalorder %s27, 0
        // Predicated region
        $region37: #{tpu_custom_call.1} parent=27 // pred_check
          %p223 = pneg %p222
        $region38: #{tpu_custom_call.1} parent=27 // pred_check_branch
          %225 = sbr.rel (%p223) target = $region40
        $region39: #{tpu_custom_call.1} parent=27 // pred_region
          %vm226 = vcmask 128000
          %227 = vst.msk [vmem:[%s219] sm:$0x3f] %vm226, 0.0
        $region40: #{tpu_custom_call.1} parent=27 // pred_fallthru
          _
        %v228 = vld [vmem:[%s185] sm:$0xff]
        %v229 = vld [vmem:[%s185 + $0x8] sm:$0xff]
        %v230 = vld [vmem:[%s194] sm:$0xff]
        %v231 = vld [vmem:[%s194 + $0x8] sm:$0xff]
        %v232 = vmul.f32 %v228, %v230
        %v233 = vmul.f32 %v229, %v231
        %v234 = vld [vmem:[%s219] sm:$0x1]
        %vm235 = vcmask 130048
        %v236 = vsel %vm235, %v232, 0.0
        %v237 = vsel %vm235, %v233, 0.0
        %v238 = vadd.f32 %v236, %v237
        %v239 = vrot.slane %v238, 4
        %v240 = vadd.f32 %v238, %v239
        %v241 = vrot.slane %v240, 2
        %v242 = vadd.f32 %v240, %v241
        %v243 = vrot.slane %v242, 1
        %v244 = vadd.f32 %v242, %v243
        %v245 = vadd.f32 %v234, %v244
        %vm246 = vcmask 122880
        %247 = vst.msk [vmem:[%s219] sm:$0x1] %vm246, %v245
        %v248 = vld [vmem:[%s219 + $0x1] sm:$0x1]
        %v249 = vsel %vm235, %v228, 0.0
        %v250 = vsel %vm235, %v229, 0.0
        %v251 = vadd.f32 %v249, %v250
        %v252 = vrot.slane %v251, 4
        %v253 = vadd.f32 %v251, %v252
        %v254 = vrot.slane %v253, 2
        %v255 = vadd.f32 %v253, %v254
        %v256 = vrot.slane %v255, 1
        %v257 = vadd.f32 %v255, %v256
        %v258 = vadd.f32 %v248, %v257
        %259 = vst.msk [vmem:[%s219 + $0x1] sm:$0x1] %vm246, %v258
        %v260 = vld [vmem:[%s219 + $0x2] sm:$0x1]
        %v261 = vsel %vm235, %v230, 0.0
        %v262 = vsel %vm235, %v231, 0.0
        %v263 = vadd.f32 %v261, %v262
        %v264 = vrot.slane %v263, 4
        %v265 = vadd.f32 %v263, %v264
        %v266 = vrot.slane %v265, 2
        %v267 = vadd.f32 %v265, %v266
        %v268 = vrot.slane %v267, 1
        %v269 = vadd.f32 %v267, %v268
        %v270 = vadd.f32 %v260, %v269
        %271 = vst.msk [vmem:[%s219 + $0x2] sm:$0x1] %vm246, %v270
        %v272 = vlog2.pop %v228
        %v273 = vmul.f32 %v272, 0.6931472
        %v274 = vlog2.pop %v229
        %v275 = vmul.f32 %v274, 0.6931472
        %v276 = vmax.f32 %v273, -100.0
        %v277 = vmax.f32 %v275, -100.0
        %v278 = vsub.f32 1.0, %v228
        %v279 = vsub.f32 1.0, %v229
        %v280 = vlog2.pop %v278
        %v281 = vmul.f32 %v280, 0.6931472
        %v282 = vlog2.pop %v279
        %v283 = vmul.f32 %v282, 0.6931472
        %v284 = vmax.f32 %v281, -100.0
        %v285 = vmax.f32 %v283, -100.0
        %v286 = vmul.f32 %v230, %v276
        %v287 = vmul.f32 %v231, %v277
        %v288 = vsub.f32 1.0, %v230
        %v289 = vsub.f32 1.0, %v231
        %v290 = vmul.f32 %v288, %v284
        %v291 = vmul.f32 %v289, %v285
        %v292 = vadd.f32 %v286, %v290
        %v293 = vadd.f32 %v287, %v291
        %v294 = vsub.f32 0.0, %v292
        %v295 = vsub.f32 0.0, %v293
        %v296 = vsub.f32 0.0, %v294
        %v297 = vsub.f32 0.0, %v295
        %v298 = vmul.f32 %v296, 1.442695
        %v299 = vpow.pop %v298
        %v300 = vmul.f32 %v297, 1.442695
        %v301 = vpow.pop %v300
        %v302 = vsub.f32 1.0, %v299
        %v303 = vsub.f32 1.0, %v301
        %v304 = vmul.f32 %v302, %v302
        %v305 = vmul.f32 %v303, %v303
        %v306 = vmul.f32 %v304, %v294
        %v307 = vmul.f32 %v305, %v295
        %v308 = vld [vmem:[%s219 + $0x3] sm:$0x1]
        %v309 = vsel %vm235, %v306, 0.0
        %v310 = vsel %vm235, %v307, 0.0
        %v311 = vadd.f32 %v309, %v310
        %v312 = vrot.slane %v311, 4
        %v313 = vadd.f32 %v311, %v312
        %v314 = vrot.slane %v313, 2
        %v315 = vadd.f32 %v313, %v314
        %v316 = vrot.slane %v315, 1
        %v317 = vadd.f32 %v315, %v316
        %v318 = vadd.f32 %v308, %v317
        %319 = vst.msk [vmem:[%s219 + $0x3] sm:$0x1] %vm246, %v318
        %v320 = vsub.f32 %v228, %v230
        %v321 = vsub.f32 %v229, %v231
        %vm324 = vcmask 1040384
        %v325 = vrot.slane %v320, 7
        %v326 = vrot.slane %v321, 7
        %v327 = vsel %vm324, %v325, %v326
        %v330 = vsel %vm324, 0.0, %v325
        %vm331 = vcmask 1046528
        %v332 = vrot.slane %v320, 1
        %v333 = vrot.slane %v321, 1
        %v334 = vsel %vm331, %v332, %v333
        %v337 = vsel %vm331, %v333, 0.0
        %v338 = vmul.f32 %v320, 2.0
        %v339 = vmul.f32 %v321, 2.0
        %v340 = vadd.f32 %v330, %v338
        %v341 = vadd.f32 %v327, %v339
        %v342 = vadd.f32 %v340, %v334
        %v343 = vadd.f32 %v341, %v337
        %v344 = vsub.f32 %v334, %v330
        %v345 = vsub.f32 %v337, %v327
        %348 = vrot.lane.b32.xlu0 %v342, 1
        %v349 = vpop.permute.xlu0 %348
        %350 = vrot.lane.b32.xlu0 %v343, 1
        %v351 = vpop.permute.xlu0 %350
        %vm354 = vcmask 7168
        %v355 = vsel %vm354, 0.0, %v349
        %v356 = vsel %vm354, 0.0, %v351
        %357 = vrot.lane.b32.xlu0 %v342, 127
        %v358 = vpop.permute.xlu0 %357
        %359 = vrot.lane.b32.xlu0 %v343, 127
        %v360 = vpop.permute.xlu0 %359
        %vm363 = vcmask 121856
        %v364 = vsel %vm363, %v358, 0.0
        %v365 = vsel %vm363, %v360, 0.0
        %368 = vrot.lane.b32.xlu0 %v344, 1
        %v369 = vpop.permute.xlu0 %368
        %370 = vrot.lane.b32.xlu0 %v345, 1
        %v371 = vpop.permute.xlu0 %370
        %v374 = vsel %vm354, 0.0, %v369
        %v375 = vsel %vm354, 0.0, %v371
        %376 = vrot.lane.b32.xlu0 %v344, 127
        %v377 = vpop.permute.xlu0 %376
        %378 = vrot.lane.b32.xlu0 %v345, 127
        %v379 = vpop.permute.xlu0 %378
        %v382 = vsel %vm363, %v377, 0.0
        %v383 = vsel %vm363, %v379, 0.0
        %v384 = vsub.f32 %v364, %v355
        %v385 = vsub.f32 %v365, %v356
        %v386 = vmul.f32 %v344, 2.0
        %v387 = vmul.f32 %v345, 2.0
        %v388 = vadd.f32 %v374, %v386
        %v389 = vadd.f32 %v375, %v387
        %v390 = vadd.f32 %v388, %v382
        %v391 = vadd.f32 %v389, %v383
        %v392 = vmul.f32 %v384, %v384
        %v393 = vmul.f32 %v385, %v385
        %v394 = vld [vmem:[%s219 + $0x4] sm:$0x1]
        %v395 = vsel %vm235, %v392, 0.0
        %v396 = vsel %vm235, %v393, 0.0
        %v397 = vadd.f32 %v395, %v396
        %v398 = vrot.slane %v397, 4
        %v399 = vadd.f32 %v397, %v398
        %v400 = vrot.slane %v399, 2
        %v401 = vadd.f32 %v399, %v400
        %v402 = vrot.slane %v401, 1
        %v403 = vadd.f32 %v401, %v402
        %v404 = vadd.f32 %v394, %v403
        %405 = vst.msk [vmem:[%s219 + $0x4] sm:$0x1] %vm246, %v404
        %v406 = vmul.f32 %v390, %v390
        %v407 = vmul.f32 %v391, %v391
        %v408 = vld [vmem:[%s219 + $0x5] sm:$0x1]
        %v409 = vsel %vm235, %v406, 0.0
        %v410 = vsel %vm235, %v407, 0.0
        %v411 = vadd.f32 %v409, %v410
        %v412 = vrot.slane %v411, 4
        %v413 = vadd.f32 %v411, %v412
        %v414 = vrot.slane %v413, 2
        %v415 = vadd.f32 %v413, %v414
        %v416 = vrot.slane %v415, 1
        %v417 = vadd.f32 %v415, %v416
        %v418 = vadd.f32 %v408, %v417
        %419 = vst.msk [vmem:[%s219 + $0x5] sm:$0x1] %vm246, %v418
        %s420 = sand.u32 %s98, 1
        %s421 = scalar_lea.sflag [#allocation4], %s420
        %s422 = sand.u32 %s98, 1
        %s423 = smul.addr %s422, 8
        %s424 = scalar_lea.vmem [#allocation7], %s423
        // Predicated region
        $region41: #{tpu_custom_call.1} parent=27 // pred_check
          %p425 = pneg %p108
        $region42: #{tpu_custom_call.1} parent=27 // pred_check_branch
          %427 = sbr.rel (%p425) target = $region44
        $region43: #{tpu_custom_call.1} parent=27 // pred_region
          %s429 = ssub.s32 128, 128
          %430 = vsyncadd %s421, %s429
          %s431 = smul.addr %s26, 128
          %s432 = scalar_lea.hbm %s2, %s431
          %s434 = sshll.u32 %s424, 4
          %s435 = int_to_ptr.vmem [resolvable:$true] %s434
          %437 = dma.vmem_to_hbm [thread:$0]  %s435, 128, %s432, %s421
        $region44: #{tpu_custom_call.1} parent=27 // pred_fallthru
          _
      $region28: #{tpu_custom_call.1} parent=5 // pred_fallthru
        _
      %p438 = scmp.le.s32.totalorder 2, %s17
      // Predicated region
      $region45: #{tpu_custom_call.1} parent=5 // pred_check
        %p439 = pneg %p438
      $region46: #{tpu_custom_call.1} parent=5 // pred_check_branch
        %441 = sbr.rel (%p439) target = $region48
      $region47: #{tpu_custom_call.1} parent=5 // pred_region
        %s442 = ssub.s32 %s17, 2
        // Predicated region
        $region49: #{tpu_custom_call.1} parent=47 // pred_check
          %p443 = pneg %p114
        $region50: #{tpu_custom_call.1} parent=47 // pred_check_branch
          %445 = sbr.rel (%p443) target = $region52
        $region51: #{tpu_custom_call.1} parent=47 // pred_region
          %s446 = sand.u32 %s99, 1
          %s447 = scalar_lea.sflag [#allocation4], %s446
          %s448 = sand.u32 %s99, 1
          %s449 = smul.addr %s448, 8
          %s450 = scalar_lea.vmem [#allocation7], %s449
          %451 = dma.done %s447, 128
        $region52: #{tpu_custom_call.1} parent=47 // pred_fallthru
          _
      $region48: #{tpu_custom_call.1} parent=5 // pred_fallthru
        _
    $region6: #{tpu_custom_call.1} parent=1 // loop_footer
      %s21 = sadd.s32 1, %s17
    $region7: #{tpu_custom_call.1} parent=1 // loop_footer_branch
      %16 = sbr.rel target = $region3
    $region8: #{tpu_custom_call.1} parent=1 // loop_exit
      _
    %452 = vsyncpa [#allocation3], 1
    %s453 = scalar_lea.sflag [#allocation3], 1
    %454 = vsyncpa %s453, 1
    %455 = vsyncpa [#allocation6], 1
    %s456 = scalar_lea.sflag [#allocation6], 1
    %457 = vsyncpa %s456, 1
    %458 = vsyncpa [#allocation4], 1
    %s459 = scalar_lea.sflag [#allocation4], 1
    %460 = vsyncpa %s459, 1

</llo_original>
